<compile_context>
chip_gen: v6e
topology: v6e:2x2x1
jax: 0.10.0
libtpu: 0.0.40
codegen_flags: <defaults>
</compile_context>

<pallas_src>
import jax
import jax.numpy as jnp
from jax.experimental import pallas as pl
from jax.experimental.pallas import tpu as pltpu


# ----------------------------------------------------------------------------
# Lambda wrapper — exact semantic mirror of the PyTorch module.
# ----------------------------------------------------------------------------
class Lambda:
    """Stores a callable; forward(*args) applies it. Mirrors nn.Module Lambda."""

    def __init__(self, forward):
        self.forward_fn = forward

    def forward(self, *args):
        return self.forward_fn(*args)

    __call__ = forward


# ----------------------------------------------------------------------------
# Pallas kernel for the example lambda:  relu(x) * 2 + 1   (elementwise)
# ----------------------------------------------------------------------------
def _lambda_elemwise_kernel(x_ref, o_ref):
    x = x_ref[...]
    # Python-int constants keep the input dtype (no float promotion).
    o_ref[...] = (jnp.maximum(x, 0) * 2 + 1).astype(o_ref.dtype)


_LANE = 128
# ~2 MiB per block: with double-buffered input + output that is ~8 MiB of live
# VMEM, well inside the scoped default on v5e/v6e (and v7x's 64 MiB physical).
_DEFAULT_BLOCK_BYTES = 2 * 1024 * 1024
# Below this size the pallas_call launch + layout plumbing dominates; plain
# jnp (fused by XLA) is strictly faster.
_PALLAS_MIN_BYTES = 256 * 1024


def _sublane_multiple(dtype):
    # Sub-32-bit dtypes pack along sublanes: f32 -> 8, bf16/f16 -> 16, int8 -> 32.
    return max(8, 32 // jnp.dtype(dtype).itemsize)


def _pallas_elemwise(x, *, block_bytes=_DEFAULT_BLOCK_BYTES):
    """relu(x)*2 + 1 as a 1-D tiled Pallas TPU kernel. Any shape, any float dtype."""
    orig_shape = x.shape
    dtype = x.dtype
    itemsize = jnp.dtype(dtype).itemsize
    total = x.size

    # Widest lane-dense layout that needs no padding (fewer, larger DMAs and
    # fully unmasked wide stores). Fall back to a minimal tail pad to 128.
    lanes = None
    for w in (2048, 1024, 512, 256, _LANE):
        if total % w == 0:
            lanes = w
            break
    flat = jnp.ravel(x)
    if lanes is None:
        lanes = _LANE
        padded = pl.cdiv(total, lanes) * lanes
        flat = jnp.pad(flat, (0, padded - total))  # only when total % 128 != 0

    rows = flat.size // lanes
    slab = flat.reshape(rows, lanes)  # lane-dense 2-D view

    # Block rows: ~block_bytes per tile, rounded to the dtype's sublane packing.
    sub = _sublane_multiple(dtype)
    block_rows = max(sub, (block_bytes // (lanes * itemsize)) // sub * sub)
    if block_rows >= rows:
        block_rows = rows          # single full-array block (any row count legal)
        grid = (1,)
    else:
        grid = (pl.cdiv(rows, block_rows),)  # ragged last block masked by Pallas

    out_slab = pl.pallas_call(
        _lambda_elemwise_kernel,
        out_shape=jax.ShapeDtypeStruct((rows, lanes), dtype),
        grid=grid,
        in_specs=[pl.BlockSpec((block_rows, lanes), lambda i: (i, 0))],
        out_specs=pl.BlockSpec((block_rows, lanes), lambda i: (i, 0)),
        compiler_params=pltpu.CompilerParams(
            # "parallel" lets v7x shard the grid across its two TensorCores;
            # measured neutral on single-TC v5e/v6e.
            dimension_semantics=("parallel",),
        ),
    )(slab)

    out_flat = out_slab.reshape(-1)
    if out_flat.size != total:
        out_flat = out_flat[:total]
    return out_flat.reshape(orig_shape)


def lambda_relu_scale_shift(x):
    """Production callable for Lambda: size-gated dispatch to the Pallas kernel."""
    if x.size * jnp.dtype(x.dtype).itemsize < _PALLAS_MIN_BYTES:
        return jnp.maximum(x, 0) * 2 + 1          # let XLA fuse tiny inputs
    return _pallas_elemwise(x)


# ----------------------------------------------------------------------------
# Demo / correctness check
# ----------------------------------------------------------------------------
if __name__ == "__main__":
    key = jax.random.PRNGKey(0)

    def ref_fn(a):
        return jnp.maximum(a, 0) * 2 + 1

    # NCHW input, same axis convention PyTorch would use.  The kernel path is
    # forced here so the demo exercises the Pallas kernel; production code
    # would use `lambda_relu_scale_shift` (which gates on size).
    x = jax.random.normal(key, (2, 4, 16, 16), dtype=jnp.float32)
    module = Lambda(_pallas_elemwise)
    y = jax.block_until_ready(module(x))
    assert y.shape == x.shape and y.dtype == x.dtype
    assert jnp.allclose(y, ref_fn(x), atol=1e-6, rtol=1e-6)

    # Multi-block + ragged-tail path: small block budget forces a tiled grid
    # (rows=20, block_rows=8 -> grid=3, last block partially masked).
    k1, k2, k3 = jax.random.split(key, 3)
    x2 = jax.random.normal(k1, (2, 4, 40, 128), dtype=jnp.float32)
    y2 = jax.block_until_ready(_pallas_elemwise(x2, block_bytes=64 * 1024))
    assert jnp.allclose(y2, ref_fn(x2), atol=1e-6, rtol=1e-6)

    # Non-128-divisible element count -> minimal tail-pad path.
    x3 = jax.random.normal(k2, (3, 5, 7, 11), dtype=jnp.float32)
    y3 = jax.block_until_ready(_pallas_elemwise(x3))
    assert y3.shape == x3.shape
    assert jnp.allclose(y3, ref_fn(x3), atol=1e-6, rtol=1e-6)

    # bf16 path: dtype-aware sublane multiple (16) + ragged last block.
    x4 = jax.random.normal(k3, (2, 4, 48, 128), dtype=jnp.bfloat16)
    y4 = jax.block_until_ready(_pallas_elemwise(x4, block_bytes=64 * 1024))
    assert y4.dtype == jnp.bfloat16
    assert jnp.allclose(y4.astype(jnp.float32),
                        ref_fn(x4).astype(jnp.float32), atol=1e-2, rtol=1e-2)

    # Size-gated dispatcher keeps tiny inputs on the plain-jnp path (no kernel).
    y5 = jax.block_until_ready(Lambda(lambda_relu_scale_shift)(x))
    assert jnp.allclose(y5, ref_fn(x), atol=1e-6, rtol=1e-6)

    print("KERNEL_OK")
</pallas_src>

<mosaic_0001>
module attributes {stable_mosaic.version = 11 : i64} {
  func.func @_lambda_elemwise_kernel(%arg0: i32, %arg1: memref<1x2048xf32, #tpu.memory_space<vmem>>, %arg2: memref<1x2048xf32, #tpu.memory_space<vmem>>) attributes {dimension_semantics = [#tpu.dimension_semantics<parallel>], iteration_bounds = array<i64: 1>, scalar_prefetch = 0 : i64, scratch_operands = 0 : i64, tpu.core_type = #tpu.core_type<tc>, window_params = [{transform_indices = @transform_0, window_bounds = array<i64: 1, 2048>}, {transform_indices = @transform_1, window_bounds = array<i64: 1, 2048>}]} {
    %c0 = arith.constant 0 : index
    %c0_0 = arith.constant 0 : index
    %0 = vector.load %arg1[%c0, %c0_0] : memref<1x2048xf32, #tpu.memory_space<vmem>>, vector<1x2048xf32>
    %cst = arith.constant 0.000000e+00 : f32
    %1 = vector.broadcast %cst : f32 to vector<1x2048xf32>
    %2 = arith.maximumf %0, %1 : vector<1x2048xf32>
    %cst_1 = arith.constant 2.000000e+00 : f32
    %3 = vector.broadcast %cst_1 : f32 to vector<1x2048xf32>
    %4 = arith.mulf %2, %3 : vector<1x2048xf32>
    %cst_2 = arith.constant 1.000000e+00 : f32
    %5 = vector.broadcast %cst_2 : f32 to vector<1x2048xf32>
    %6 = arith.addf %4, %5 : vector<1x2048xf32>
    %c0_3 = arith.constant 0 : index
    %c0_4 = arith.constant 0 : index
    %7 = vector.load %arg2[%c0_3, %c0_4] : memref<1x2048xf32, #tpu.memory_space<vmem>>, vector<1x2048xf32>
    tpu.vector_store %arg2[%c0_3, %c0_4], %6 {strides = array<i32>} : memref<1x2048xf32, #tpu.memory_space<vmem>>, vector<1x2048xf32>,
    return
  }
  func.func @transform_0(%arg0: i32) -> (i32, i32) {
    %c0_i32 = arith.constant 0 : i32
    %c0_i32_0 = arith.constant 0 : i32
    return %arg0, %c0_i32 : i32, i32
  }
  func.func @transform_1(%arg0: i32) -> (i32, i32) {
    %c0_i32 = arith.constant 0 : i32
    %c0_i32_0 = arith.constant 0 : i32
    return %arg0, %c0_i32 : i32, i32
  }
}

</mosaic_0001>

<llo_original>
// kernel: tpu_custom_call.1
$region0: #{tpu_custom_call.1}
  #allocation0 [shape = 'u32[]', space=smem, size = 0x4, offset = 0x4, fixed_abs, tag = 'smem constant byte address 0x4 - core index']
  #allocation1 [shape = 'u32[144,128]{1,0:T(1,128)}', space=vmem, size = 0x12000, scoped, tag = 'internal scratch']
  %s0 = inlined_call_operand.hbm [shape: f32[1,2048], index: 0, kind: input, shape index: {}]
  %s1 = inlined_call_operand.hbm [shape: f32[1,2048], index: 1, kind: output, shape index: {}]
  %s2 = sld [smem:[#allocation0]]
  $region18: #{tpu_custom_call.1} parent=0
    _
  %s4 = ssub.s32 1, %s2
  %s5 = scalar_select 0, %s4, %s2
  $region1: #{tpu_custom_call.1} parent=0
    #allocation2 [shape = 'u8[8192]{0}', space=vmem, size = 0x2000, scoped, tag = 'input window, operand 0, single buffered']
    #allocation3 [shape = 's32[1]{0}', space=sflag, size = 0x4, scoped, tag = 'scoped memory for tpu_custom_call.1']
    #allocation4 [shape = 's32[1]{0}', space=sflag, size = 0x4, scoped, tag = 'scoped memory for tpu_custom_call.1']
    #allocation5 [shape = 'u8[8192]{0}', space=vmem, size = 0x2000, scoped, tag = 'output window, operand 0, single buffered']
    %6 = vsyncpa [#allocation3], 0
    %7 = vsyncpa [#allocation4], 0
    // Predicated region
    $region2: #{tpu_custom_call.1} parent=1 // pred_check
      _
    $region3: #{tpu_custom_call.1} parent=1 // pred_check_branch
      %9 = sbr.rel (0) target = $region5
    $region4: #{tpu_custom_call.1} parent=1 // pred_region
      %s11 = ssub.s32 256, 256
      %12 = vsyncadd [#allocation3], %s11
      %s14 = sshll.u32 [#allocation2], 4
      %s15 = int_to_ptr.vmem [resolvable:$true] %s14
      %17 = dma.hbm_to_vmem [thread:$0]  %s0, 256, %s15, [#allocation3]
    $region5: #{tpu_custom_call.1} parent=1 // pred_fallthru
      _
    // Predicated region
    $region6: #{tpu_custom_call.1} parent=1 // pred_check
      _
    $region7: #{tpu_custom_call.1} parent=1 // pred_check_branch
      %19 = sbr.rel (0) target = $region9
    $region8: #{tpu_custom_call.1} parent=1 // pred_region
      %20 = dma.done [#allocation3], 256
    $region9: #{tpu_custom_call.1} parent=1 // pred_fallthru
      _
    %v21 = vld [vmem:[#allocation2] sm:$0xff]
    %v22 = vld [vmem:[#allocation2 + $0x8] sm:$0xff]
    %v23 = vmax.f32 %v21, 0.0
    %v24 = vmax.f32 %v22, 0.0
    %v25 = vmul.f32 %v23, 2.0
    %v26 = vmul.f32 %v24, 2.0
    %v27 = vadd.f32 %v25, 1.0
    %v28 = vadd.f32 %v26, 1.0
    %29 = vst [vmem:[#allocation5] sm:$0xff] %v27
    %30 = vst [vmem:[#allocation5 + $0x8] sm:$0xff] %v28
    // Predicated region
    $region10: #{tpu_custom_call.1} parent=1 // pred_check
      _
    $region11: #{tpu_custom_call.1} parent=1 // pred_check_branch
      %32 = sbr.rel (0) target = $region13
    $region12: #{tpu_custom_call.1} parent=1 // pred_region
      %s34 = ssub.s32 256, 256
      %35 = vsyncadd [#allocation4], %s34
      %s37 = sshll.u32 [#allocation5], 4
      %s38 = int_to_ptr.vmem [resolvable:$true] %s37
      %40 = dma.vmem_to_hbm [thread:$0]  %s38, 256, %s1, [#allocation4]
    $region13: #{tpu_custom_call.1} parent=1 // pred_fallthru
      _
    // Predicated region
    $region14: #{tpu_custom_call.1} parent=1 // pred_check
      _
    $region15: #{tpu_custom_call.1} parent=1 // pred_check_branch
      %42 = sbr.rel (0) target = $region17
    $region16: #{tpu_custom_call.1} parent=1 // pred_region
      %43 = dma.done [#allocation4], 256
    $region17: #{tpu_custom_call.1} parent=1 // pred_fallthru
      _
    %44 = vsyncpa [#allocation3], 1
    %45 = vsyncpa [#allocation4], 1

</llo_original>
